<compile_context>
chip_gen: v7x
topology: tpu7x:2x2x1
jax: 0.10.0
libtpu: 0.0.40
codegen_flags: <defaults>
</compile_context>

<pallas_src>
import jax
import jax.numpy as jnp
from jax import lax
from jax.experimental import pallas as pl
from jax.experimental.pallas import tpu as pltpu


def _lovasz_kernel(err_ref, gt_ref, gts_ref, tri_ref, out_ref,
                   carry_cs_ref, carry_jac_ref):
    # err_ref : (TN, L) f32   sorted errors chunk
    # gt_ref  : (TN, L) bf16  sorted binary targets chunk
    # gts_ref : (TN, 1) f32   per-row total foreground count
    # tri_ref : (L, L)  bf16  constant upper-triangular mask (tri[m,c]=1 if m<=c)
    # out_ref : (TN, 1) f32   per-row loss accumulator (VMEM-resident across chunks)
    k = pl.program_id(1)

    @pl.when(k == 0)
    def _():
        out_ref[...] = jnp.zeros_like(out_ref)
        carry_cs_ref[...] = jnp.zeros_like(carry_cs_ref)
        carry_jac_ref[...] = jnp.zeros_like(carry_jac_ref)

    errs = err_ref[...]                                      # (TN, L) f32
    gt = gt_ref[...]                                         # (TN, L) bf16
    gts = gts_ref[...]                                       # (TN, 1) f32
    tn, l = errs.shape

    # Blocked inclusive cumsum along lanes: local triangular matmul (MXU, f32
    # accumulation is exact for binary gt) + running per-row carry.
    cs_local = jnp.dot(gt, tri_ref[...],
                       preferred_element_type=jnp.float32)   # (TN, L)
    cs = cs_local + carry_cs_ref[...]                         # add carry (TN,1)

    # Global 1-based position of each lane in the full row.
    lane = lax.broadcasted_iota(jnp.int32, (tn, l), 1)
    pos = (lane + (k * l + 1)).astype(jnp.float32)

    intersection = gts - cs
    union = gts + pos - cs                                    # >= pos >= 1 (no div0)
    jaccard = 1.0 - intersection / union                      # (TN, L)

    # grad[p] = jaccard[p] - jaccard[p-1]; across the chunk boundary the
    # previous value comes from the carry (0 for the global first position,
    # which reproduces grad[0] = jaccard[0]).
    prev = pltpu.roll(jaccard, shift=1, axis=1)               # XLU lane rotate
    prev = jnp.where(lane == 0,
                     jnp.broadcast_to(carry_jac_ref[...], jaccard.shape),
                     prev)
    grad = jaccard - prev

    out_ref[...] += jnp.sum(jnp.maximum(errs, 0.0) * grad,
                            axis=1, keepdims=True)

    # Carries for the next lane chunk of this row tile.
    carry_cs_ref[...] = cs[:, l - 1:l]
    carry_jac_ref[...] = jaccard[:, l - 1:l]


def _ceil_to(x, m):
    return ((x + m - 1) // m) * m


def lovasz_loss_pallas(inp, tgt, *, row_tile=256, lane_chunk=256):
    """inp, tgt: (B, C, H, W) arrays (NCHW).  Returns scalar float32 loss.

    row_tile / lane_chunk: tiling knobs (lane_chunk=128 recommended on v5e to
    match its 128x128 MXU; 256 on v6e/v7x).
    """
    B, C, H, W = inp.shape
    N, P = B * C, H * W

    x = inp.reshape(N, P).astype(jnp.float32)
    t = tgt.reshape(N, P).astype(jnp.float32)

    signs = 2.0 * t - 1.0
    errors = 1.0 - x * signs
    gts = jnp.sum(t, axis=-1, keepdims=True)                  # permutation-invariant

    # TODO(synk): descending sort + permutation gather has no Pallas TPU
    # primitive; done in plain JAX (single fused gather on a stacked array).
    order = jnp.argsort(-errors, axis=-1)
    stacked = jnp.stack([errors, t], axis=0)                  # (2, N, P)
    sorted_both = jnp.take_along_axis(stacked, order[None, :, :], axis=-1)
    errors_sorted = sorted_both[0]
    gt_sorted = sorted_both[1]

    # Tile sizes: lane chunk multiple of 128, row tile multiple of 8.
    tn = min(row_tile, _ceil_to(N, 8))
    l = min(lane_chunk, _ceil_to(P, 128))
    n_pad = _ceil_to(N, tn)
    p_pad = _ceil_to(P, l)

    # Padding is benign: padded err = 0 -> relu(err)=0 so padded lanes/rows
    # contribute nothing; padded gt = 0 so cumsums at real positions are
    # unchanged (pads are appended after the sorted real values).
    err_p = jnp.pad(errors_sorted, ((0, n_pad - N), (0, p_pad - P)))
    gt_p = jnp.pad(gt_sorted.astype(jnp.bfloat16),
                   ((0, n_pad - N), (0, p_pad - P)))
    gts_p = jnp.pad(gts, ((0, n_pad - N), (0, 0)))

    # Constant L x L upper-triangular mask (bf16 operand, exact for binary gt).
    tri = (lax.broadcasted_iota(jnp.int32, (l, l), 0)
           <= lax.broadcasted_iota(jnp.int32, (l, l), 1)).astype(jnp.bfloat16)

    grid = (n_pad // tn, p_pad // l)

    out = pl.pallas_call(
        _lovasz_kernel,
        out_shape=jax.ShapeDtypeStruct((n_pad, 1), jnp.float32),
        grid_spec=pltpu.PrefetchScalarGridSpec(
            num_scalar_prefetch=0,
            grid=grid,
            in_specs=[
                pl.BlockSpec((tn, l), lambda i, k: (i, k)),    # errors_sorted
                pl.BlockSpec((tn, l), lambda i, k: (i, k)),    # gt_sorted (bf16)
                pl.BlockSpec((tn, 1), lambda i, k: (i, 0)),    # gts
                pl.BlockSpec((l, l), lambda i, k: (0, 0)),     # triangular mask
            ],
            out_specs=pl.BlockSpec((tn, 1), lambda i, k: (i, 0)),
            scratch_shapes=[
                pltpu.VMEM((tn, 1), jnp.float32),              # running cumsum carry
                pltpu.VMEM((tn, 1), jnp.float32),              # previous jaccard carry
            ],
        ),
        compiler_params=pltpu.CompilerParams(
            dimension_semantics=("parallel", "arbitrary")),
    )(err_p, gt_p, gts_p, tri)

    return jnp.sum(out[:N, 0]) / N


def lovasz_loss_ref(inp, tgt):
    """Pure-JAX reference mirroring the PyTorch module (per-channel loop)."""
    B, C, H, W = inp.shape
    loss = 0.0
    for i in range(B):
        for j in range(C):
            x = inp[i, j].reshape(-1).astype(jnp.float32)
            t = tgt[i, j].reshape(-1).astype(jnp.float32)
            signs = 2.0 * t - 1.0
            errors = 1.0 - x * signs
            order = jnp.argsort(-errors)
            errors_sorted = errors[order]
            gt_sorted = t[order]
            gts = gt_sorted.sum()
            intersection = gts - jnp.cumsum(gt_sorted)
            union = gts + jnp.cumsum(1.0 - gt_sorted)
            jaccard = 1.0 - intersection / union
            grad = jnp.concatenate([jaccard[:1], jaccard[1:] - jaccard[:-1]])
            channel_loss = jnp.dot(jnp.maximum(errors_sorted, 0.0), grad)
            loss = loss + channel_loss / (B * C)
    return loss


if __name__ == "__main__":
    key = jax.random.PRNGKey(0)
    k1, k2 = jax.random.split(key)

    B, C, H, W = 2, 4, 16, 16
    x = jax.random.normal(k1, (B, C, H, W), dtype=jnp.float32)
    # binary targets, as the Lovasz loss expects
    target = jax.random.bernoulli(k2, 0.5, (B, C, H, W)).astype(jnp.float32)

    # lane_chunk=128 so the toy P=256 exercises the multi-chunk carry path.
    loss = jax.block_until_ready(lovasz_loss_pallas(x, target, lane_chunk=128))
    ref = jax.block_until_ready(lovasz_loss_ref(x, target))

    assert jnp.allclose(loss, ref, atol=1e-4, rtol=1e-4), (loss, ref)
    print("KERNEL_OK")
</pallas_src>

<mosaic_0001>
module attributes {stable_mosaic.version = 11 : i64} {
  func.func @_lovasz_kernel(%arg0: i32, %arg1: i32, %arg2: memref<8x128xf32, #tpu.memory_space<vmem>>, %arg3: memref<8x128xbf16, #tpu.memory_space<vmem>>, %arg4: memref<8x1xf32, #tpu.memory_space<vmem>>, %arg5: memref<128x128xbf16, #tpu.memory_space<vmem>>, %arg6: memref<8x1xf32, #tpu.memory_space<vmem>>, %arg7: memref<8x1xf32, #tpu.memory_space<vmem>>, %arg8: memref<8x1xf32, #tpu.memory_space<vmem>>) attributes {dimension_semantics = [#tpu.dimension_semantics<parallel>, #tpu.dimension_semantics<arbitrary>], iteration_bounds = array<i64: 1, 2>, scalar_prefetch = 0 : i64, scratch_operands = 2 : i64, tpu.core_type = #tpu.core_type<tc>, window_params = [{transform_indices = @transform_0, window_bounds = array<i64: 8, 128>}, {transform_indices = @transform_1, window_bounds = array<i64: 8, 128>}, {transform_indices = @transform_2, window_bounds = array<i64: 8, 1>}, {pipeline_mode = #tpu.pipeline_mode<synchronous>, transform_indices = @transform_3, window_bounds = array<i64: 128, 128>}, {transform_indices = @transform_4, window_bounds = array<i64: 8, 1>}]} {
    %c0_i32 = arith.constant 0 : i32
    %0 = arith.cmpi eq, %arg1, %c0_i32 : i32
    %1 = arith.extui %0 : i1 to i32
    %c0_i32_0 = arith.constant 0 : i32
    %2 = arith.cmpi ne, %1, %c0_i32_0 : i32
    scf.if %2 {
      %cst_25 = arith.constant 0.000000e+00 : f32
      %45 = vector.broadcast %cst_25 : f32 to vector<8x1xf32>
      %c0_26 = arith.constant 0 : index
      %c0_27 = arith.constant 0 : index
      %46 = vector.load %arg6[%c0_26, %c0_27] : memref<8x1xf32, #tpu.memory_space<vmem>>, vector<8x1xf32>
      tpu.vector_store %arg6[%c0_26, %c0_27], %45 {strides = array<i32>} : memref<8x1xf32, #tpu.memory_space<vmem>>, vector<8x1xf32>,
      %cst_28 = arith.constant 0.000000e+00 : f32
      %47 = vector.broadcast %cst_28 : f32 to vector<8x1xf32>
      %c0_29 = arith.constant 0 : index
      %c0_30 = arith.constant 0 : index
      %48 = vector.load %arg7[%c0_29, %c0_30] : memref<8x1xf32, #tpu.memory_space<vmem>>, vector<8x1xf32>
      tpu.vector_store %arg7[%c0_29, %c0_30], %47 {strides = array<i32>} : memref<8x1xf32, #tpu.memory_space<vmem>>, vector<8x1xf32>,
      %cst_31 = arith.constant 0.000000e+00 : f32
      %49 = vector.broadcast %cst_31 : f32 to vector<8x1xf32>
      %c0_32 = arith.constant 0 : index
      %c0_33 = arith.constant 0 : index
      %50 = vector.load %arg8[%c0_32, %c0_33] : memref<8x1xf32, #tpu.memory_space<vmem>>, vector<8x1xf32>
      tpu.vector_store %arg8[%c0_32, %c0_33], %49 {strides = array<i32>} : memref<8x1xf32, #tpu.memory_space<vmem>>, vector<8x1xf32>,
    } else {
    }
    %c0 = arith.constant 0 : index
    %c0_1 = arith.constant 0 : index
    %3 = vector.load %arg2[%c0, %c0_1] : memref<8x128xf32, #tpu.memory_space<vmem>>, vector<8x128xf32>
    %c0_2 = arith.constant 0 : index
    %c0_3 = arith.constant 0 : index
    %4 = vector.load %arg3[%c0_2, %c0_3] : memref<8x128xbf16, #tpu.memory_space<vmem>>, vector<8x128xbf16>
    %c0_4 = arith.constant 0 : index
    %c0_5 = arith.constant 0 : index
    %5 = vector.load %arg4[%c0_4, %c0_5] : memref<8x1xf32, #tpu.memory_space<vmem>>, vector<8x1xf32>
    %c0_6 = arith.constant 0 : index
    %c0_7 = arith.constant 0 : index
    %6 = vector.load %arg5[%c0_6, %c0_7] : memref<128x128xbf16, #tpu.memory_space<vmem>>, vector<128x128xbf16>
    %cst = arith.constant dense<0.000000e+00> : vector<8x128xf32>
    %7 = tpu.matmul %4, %6, %cst {dimension_numbers = #tpu.dot_dimension_numbers<[1], [0], [0], [1], [0, 0, 1, 1], [], []>} : vector<8x128xbf16>, vector<128x128xbf16>, vector<8x128xf32> -> vector<8x128xf32>
    %c0_8 = arith.constant 0 : index
    %c0_9 = arith.constant 0 : index
    %8 = vector.load %arg7[%c0_8, %c0_9] : memref<8x1xf32, #tpu.memory_space<vmem>>, vector<8x1xf32>
    %9 = vector.broadcast %8 : vector<8x1xf32> to vector<8x128xf32>
    %10 = arith.addf %7, %9 : vector<8x128xf32>
    %11 = tpu.iota {dimensions = array<i32: 1>} : vector<8x128xi32>
    %c128_i32 = arith.constant 128 : i32
    %12 = arith.muli %arg1, %c128_i32 : i32
    %c1_i32 = arith.constant 1 : i32
    %13 = arith.addi %12, %c1_i32 : i32
    %14 = vector.broadcast %13 : i32 to vector<8x128xi32>
    %15 = arith.addi %11, %14 : vector<8x128xi32>
    %16 = arith.sitofp %15 : vector<8x128xi32> to vector<8x128xf32>
    %17 = vector.broadcast %5 : vector<8x1xf32> to vector<8x128xf32>
    %18 = arith.subf %17, %10 : vector<8x128xf32>
    %19 = vector.broadcast %5 : vector<8x1xf32> to vector<8x128xf32>
    %20 = arith.addf %19, %16 : vector<8x128xf32>
    %21 = arith.subf %20, %10 : vector<8x128xf32>
    %22 = arith.divf %18, %21 : vector<8x128xf32>
    %cst_10 = arith.constant 1.000000e+00 : f32
    %23 = vector.broadcast %cst_10 : f32 to vector<8x128xf32>
    %24 = arith.subf %23, %22 : vector<8x128xf32>
    %c1_i32_11 = arith.constant 1 : i32
    %25 = tpu.dynamic_rotate %24 by %c1_i32_11 dim 1 : vector<8x128xf32>, i32 -> vector<8x128xf32>
    %c0_i32_12 = arith.constant 0 : i32
    %26 = vector.broadcast %c0_i32_12 : i32 to vector<8x128xi32>
    %27 = arith.cmpi eq, %11, %26 : vector<8x128xi32>
    %c0_13 = arith.constant 0 : index
    %c0_14 = arith.constant 0 : index
    %28 = vector.load %arg8[%c0_13, %c0_14] : memref<8x1xf32, #tpu.memory_space<vmem>>, vector<8x1xf32>
    %29 = vector.shape_cast %28 : vector<8x1xf32> to vector<8x1xf32>
    %30 = vector.broadcast %29 : vector<8x1xf32> to vector<8x128xf32>
    %31 = arith.select %27, %30, %25 : vector<8x128xi1>, vector<8x128xf32>
    %32 = arith.subf %24, %31 : vector<8x128xf32>
    %c0_15 = arith.constant 0 : index
    %c0_16 = arith.constant 0 : index
    %33 = vector.load %arg6[%c0_15, %c0_16] : memref<8x1xf32, #tpu.memory_space<vmem>>, vector<8x1xf32>
    %cst_17 = arith.constant 0.000000e+00 : f32
    %34 = vector.broadcast %cst_17 : f32 to vector<8x128xf32>
    %35 = arith.maximumf %3, %34 : vector<8x128xf32>
    %36 = arith.mulf %35, %32 : vector<8x128xf32>
    %cst_18 = arith.constant dense<0.000000e+00> : vector<8xf32>
    %37 = vector.multi_reduction <add>, %36, %cst_18 [1] : vector<8x128xf32> to vector<8xf32>
    %38 = vector.shape_cast %37 : vector<8xf32> to vector<8x1xf32>
    %39 = arith.addf %33, %38 : vector<8x1xf32>
    %c0_19 = arith.constant 0 : index
    %c0_20 = arith.constant 0 : index
    %40 = vector.load %arg6[%c0_19, %c0_20] : memref<8x1xf32, #tpu.memory_space<vmem>>, vector<8x1xf32>
    tpu.vector_store %arg6[%c0_19, %c0_20], %39 {strides = array<i32>} : memref<8x1xf32, #tpu.memory_space<vmem>>, vector<8x1xf32>,
    %41 = vector.extract_strided_slice %10 {offsets = [0, 127], sizes = [8, 1], strides = [1, 1]} : vector<8x128xf32> to vector<8x1xf32>
    %c0_21 = arith.constant 0 : index
    %c0_22 = arith.constant 0 : index
    %42 = vector.load %arg7[%c0_21, %c0_22] : memref<8x1xf32, #tpu.memory_space<vmem>>, vector<8x1xf32>
    tpu.vector_store %arg7[%c0_21, %c0_22], %41 {strides = array<i32>} : memref<8x1xf32, #tpu.memory_space<vmem>>, vector<8x1xf32>,
    %43 = vector.extract_strided_slice %24 {offsets = [0, 127], sizes = [8, 1], strides = [1, 1]} : vector<8x128xf32> to vector<8x1xf32>
    %c0_23 = arith.constant 0 : index
    %c0_24 = arith.constant 0 : index
    %44 = vector.load %arg8[%c0_23, %c0_24] : memref<8x1xf32, #tpu.memory_space<vmem>>, vector<8x1xf32>
    tpu.vector_store %arg8[%c0_23, %c0_24], %43 {strides = array<i32>} : memref<8x1xf32, #tpu.memory_space<vmem>>, vector<8x1xf32>,
    return
  }
  func.func @transform_0(%arg0: i32, %arg1: i32) -> (i32, i32) {
    %c0_i32 = arith.constant 0 : i32
    return %arg0, %arg1 : i32, i32
  }
  func.func @transform_1(%arg0: i32, %arg1: i32) -> (i32, i32) {
    %c0_i32 = arith.constant 0 : i32
    return %arg0, %arg1 : i32, i32
  }
  func.func @transform_2(%arg0: i32, %arg1: i32) -> (i32, i32) {
    %c0_i32 = arith.constant 0 : i32
    %c0_i32_0 = arith.constant 0 : i32
    return %arg0, %c0_i32 : i32, i32
  }
  func.func @transform_3(%arg0: i32, %arg1: i32) -> (i32, i32) {
    %c0_i32 = arith.constant 0 : i32
    %c0_i32_0 = arith.constant 0 : i32
    %c0_i32_1 = arith.constant 0 : i32
    return %c0_i32, %c0_i32_0 : i32, i32
  }
  func.func @transform_4(%arg0: i32, %arg1: i32) -> (i32, i32) {
    %c0_i32 = arith.constant 0 : i32
    %c0_i32_0 = arith.constant 0 : i32
    return %arg0, %c0_i32 : i32, i32
  }
}

</mosaic_0001>

<llo_original>
// kernel: tpu_custom_call.1
$region0: #{tpu_custom_call.1}
  #allocation0 [shape = 'u32[]', space=smem, size = 0x4, offset = 0x4, fixed_abs, tag = 'smem constant byte address 0x4 - core index']
  #allocation1 [shape = 'u32[144,128]{1,0:T(1,128)}', space=vmem, size = 0x12000, scoped, tag = 'internal scratch']
  #allocation2 [shape = 'f32[8,1]{1,0:T(8,128)}', space=vmem, size = 0x1000, scoped, tag = 'scratch operand']
  #allocation3 [shape = 'f32[8,1]{1,0:T(8,128)}', space=vmem, size = 0x1000, scoped, tag = 'scratch operand']
  %s0 = inlined_call_operand.hbm [shape: f32[8,256], index: 0, kind: input, shape index: {}]
  %s1 = inlined_call_operand.vmem [shape: bf16[8,256], index: 1, kind: input, shape index: {}]
  %s2 = inlined_call_operand.vmem [shape: f32[8,1], index: 2, kind: input, shape index: {}]
  %s3 = inlined_call_operand.hbm [shape: bf16[128,128], index: 3, kind: input, shape index: {}]
  %s4 = inlined_call_operand.vmem [shape: f32[8,1], index: 4, kind: output, shape index: {}]
  %s5 = sld [smem:[#allocation0]]
  $region61: #{tpu_custom_call.1} parent=0
    _
  %s7 = ssub.s32 1, %s5
  %s8 = scalar_select 0, %s7, %s5
  $region1: #{tpu_custom_call.1} parent=0
    #allocation4 [shape = 'u8[8192]{0}', space=vmem, size = 0x2000, scoped, tag = 'input window, operand 0']
    #allocation5 [shape = 's32[2]{0}', space=sflag, size = 0x8, scoped, tag = 'scoped memory for tpu_custom_call.1']
    #allocation6 [shape = 'u8[32768]{0}', space=vmem, size = 0x8000, scoped, tag = 'input window, operand 3, single buffered']
    #allocation7 [shape = 's32[1]{0}', space=sflag, size = 0x4, scoped, tag = 'scoped memory for tpu_custom_call.1']
    %9 = vsyncpa [#allocation5], 0
    %s10 = scalar_lea.sflag [#allocation5], 1
    %11 = vsyncpa %s10, 0
    %12 = vsyncpa [#allocation7], 0
    loop: start=0, step=1, limit=4
    $region2: #{tpu_custom_call.1} parent=1 // loop_pre_header
      _
    $region3: #{tpu_custom_call.1} parent=1 // loop_header
      %s14 = sphi 0, %s18
      %p15 = scmp.ge.s32.totalorder %s14, 4
      %s21 = sphi 0, %s33
      %s22 = sphi 0, %s29
      %s23 = sphi 0, %s21
      %s24 = sphi 0, %s22
      %s25 = sphi 0, %s23
      %s26 = sphi 0, %s24
      %s38 = sphi 0, %s40
      %s41 = sphi 0, %s38
      %s42 = sphi 0, %s41
      %s58 = sphi 0, %s42
      %s66 = sphi 0, %s68
      %s69 = sphi 0, %s66
      %s70 = sphi 0, %s69
      %s86 = sphi 0, %s70
      %s92 = sphi 0, %s94
      %s95 = sphi 0, %s92
      %s96 = sphi 0, %s95
      %s112 = sphi 0, %s96
      %s116 = sphi 0, %s116
      %s118 = sphi 0, %s116
      %s119 = sphi 0, %s118
      %s133 = sphi 0, %s119
      %s139 = sphi 0, %s141
      %s142 = sphi 0, %s139
      %s143 = sphi 0, %s142
      %s159 = sphi 0, %s143
    $region4: #{tpu_custom_call.1} parent=1 // loop_header_branch
      %17 = sbr.rel (%p15) target = $region8
    $region5: #{tpu_custom_call.1} parent=1 // loop_body
      %s19 = ssub.s32 %s14, 1
      %s20 = ssub.s32 %s14, 2
      %s27 = sadd.s32 1, %s22
      %p28 = scmp.ge.s32.totalorder %s27, 2
      %s29 = scalar_select %p28, 0, %s27
      %s30 = sadd.s32 1, %s21
      %s31 = scalar_select %p28, %s30, %s21
      %p32 = scmp.ge.s32.totalorder %s31, 1
      %s33 = scalar_select %p32, 0, %s31
      %s34 = ssub.s32 %s21, %s33
      %s35 = ssub.s32 %s22, %s29
      %s36 = sor.u32 %s34, %s35
      %p37 = scmp.eq.s32.totalorder %s36, 0
      %s39 = sadd.s32 %s38, 1
      %s40 = scalar_select %p37, %s38, %s39
      %p43 = pneg %p37
      %p44 = scmp.eq.s32.totalorder %s14, 1
      %p45 = por %p43, %p44
      %p46 = scmp.ne.s32.totalorder %s38, %s41
      %p47 = scmp.eq.s32.totalorder %s14, 0
      %p48 = por %p46, %p47
      %p49 = scmp.ne.s32.totalorder %s38, %s41
      %p50 = scmp.eq.s32.totalorder %s19, 1
      %p51 = por %p49, %p50
      %p52 = scmp.ne.s32.totalorder %s41, %s42
      %p53 = scmp.eq.s32.totalorder %s19, 0
      %p54 = por %p52, %p53
      %p55 = scmp.ne.s32.totalorder %s41, %s42
      %p56 = scmp.eq.s32.totalorder %s20, 1
      %p57 = por %p55, %p56
      %p59 = scmp.ne.s32.totalorder %s42, %s58
      %p60 = scmp.eq.s32.totalorder %s20, 0
      %p61 = por %p59, %p60
      %s62 = ssub.s32 %s21, %s33
      %s63 = ssub.s32 %s22, %s29
      %s64 = sor.u32 %s62, %s63
      %p65 = scmp.eq.s32.totalorder %s64, 0
      %s67 = sadd.s32 %s66, 1
      %s68 = scalar_select %p65, %s66, %s67
      %p71 = pneg %p65
      %p72 = scmp.eq.s32.totalorder %s14, 1
      %p73 = por %p71, %p72
      %p74 = scmp.ne.s32.totalorder %s66, %s69
      %p75 = scmp.eq.s32.totalorder %s14, 0
      %p76 = por %p74, %p75
      %p77 = scmp.ne.s32.totalorder %s66, %s69
      %p78 = scmp.eq.s32.totalorder %s19, 1
      %p79 = por %p77, %p78
      %p80 = scmp.ne.s32.totalorder %s69, %s70
      %p81 = scmp.eq.s32.totalorder %s19, 0
      %p82 = por %p80, %p81
      %p83 = scmp.ne.s32.totalorder %s69, %s70
      %p84 = scmp.eq.s32.totalorder %s20, 1
      %p85 = por %p83, %p84
      %p87 = scmp.ne.s32.totalorder %s70, %s86
      %p88 = scmp.eq.s32.totalorder %s20, 0
      %p89 = por %p87, %p88
      %s90 = ssub.s32 %s21, %s33
      %p91 = scmp.eq.s32.totalorder %s90, 0
      %s93 = sadd.s32 %s92, 1
      %s94 = scalar_select %p91, %s92, %s93
      %p97 = pneg %p91
      %p98 = scmp.eq.s32.totalorder %s14, 1
      %p99 = por %p97, %p98
      %p100 = scmp.ne.s32.totalorder %s92, %s95
      %p101 = scmp.eq.s32.totalorder %s14, 0
      %p102 = por %p100, %p101
      %p103 = scmp.ne.s32.totalorder %s92, %s95
      %p104 = scmp.eq.s32.totalorder %s19, 1
      %p105 = por %p103, %p104
      %p106 = scmp.ne.s32.totalorder %s95, %s96
      %p107 = scmp.eq.s32.totalorder %s19, 0
      %p108 = por %p106, %p107
      %p109 = scmp.ne.s32.totalorder %s95, %s96
      %p110 = scmp.eq.s32.totalorder %s20, 1
      %p111 = por %p109, %p110
      %p113 = scmp.ne.s32.totalorder %s96, %s112
      %p114 = scmp.eq.s32.totalorder %s20, 0
      %p115 = por %p113, %p114
      %s117 = sadd.s32 %s116, 1
      %p120 = scmp.eq.s32.totalorder %s14, 1
      %p121 = scmp.ne.s32.totalorder %s116, %s118
      %p122 = scmp.eq.s32.totalorder %s14, 0
      %p123 = por %p121, %p122
      %p124 = scmp.ne.s32.totalorder %s116, %s118
      %p125 = scmp.eq.s32.totalorder %s19, 1
      %p126 = por %p124, %p125
      %p127 = scmp.ne.s32.totalorder %s118, %s119
      %p128 = scmp.eq.s32.totalorder %s19, 0
      %p129 = por %p127, %p128
      %p130 = scmp.ne.s32.totalorder %s118, %s119
      %p131 = scmp.eq.s32.totalorder %s20, 1
      %p132 = por %p130, %p131
      %p134 = scmp.ne.s32.totalorder %s119, %s133
      %p135 = scmp.eq.s32.totalorder %s20, 0
      %p136 = por %p134, %p135
      %s137 = ssub.s32 %s21, %s33
      %p138 = scmp.eq.s32.totalorder %s137, 0
      %s140 = sadd.s32 %s139, 1
      %s141 = scalar_select %p138, %s139, %s140
      %p144 = pneg %p138
      %p145 = scmp.eq.s32.totalorder %s14, 1
      %p146 = por %p144, %p145
      %p147 = scmp.ne.s32.totalorder %s139, %s142
      %p148 = scmp.eq.s32.totalorder %s14, 0
      %p149 = por %p147, %p148
      %p150 = scmp.ne.s32.totalorder %s139, %s142
      %p151 = scmp.eq.s32.totalorder %s19, 1
      %p152 = por %p150, %p151
      %p153 = scmp.ne.s32.totalorder %s142, %s143
      %p154 = scmp.eq.s32.totalorder %s19, 0
      %p155 = por %p153, %p154
      %p156 = scmp.ne.s32.totalorder %s142, %s143
      %p157 = scmp.eq.s32.totalorder %s20, 1
      %p158 = por %p156, %p157
      %p160 = scmp.ne.s32.totalorder %s143, %s159
      %p161 = scmp.eq.s32.totalorder %s20, 0
      %p162 = por %p160, %p161
      %p163 = scmp.le.s32.totalorder 1, %s14
      %p164 = scmp.lt.s32.totalorder %s14, 3
      %p165 = pnand %p163, %p164
      %p166 = pneg %p165
      // Predicated region
      $region9: #{tpu_custom_call.1} parent=5 // pred_check
        _
      $region10: #{tpu_custom_call.1} parent=5 // pred_check_branch
        %168 = sbr.rel (%p165) target = $region12
      $region11: #{tpu_custom_call.1} parent=5 // pred_region
        %s169 = ssub.s32 %s14, 1
        // Predicated region
        $region13: #{tpu_custom_call.1} parent=11 // pred_check
          %p170 = pneg %p108
        $region14: #{tpu_custom_call.1} parent=11 // pred_check_branch
          %172 = sbr.rel (%p170) target = $region16
        $region15: #{tpu_custom_call.1} parent=11 // pred_region
          %p173 = scmp.lt.s32.totalorder %s23, 0
          %s174 = scalar_select %p173, %s23, 0
          %s175 = smul.addr %s174, 8
          %s176 = scalar_lea.vmem %s2, %s175
        $region16: #{tpu_custom_call.1} parent=11 // pred_fallthru
          _
        // Predicated region
        $region17: #{tpu_custom_call.1} parent=11 // pred_check
          %p177 = pneg %p129
        $region18: #{tpu_custom_call.1} parent=11 // pred_check_branch
          %179 = sbr.rel (%p177) target = $region20
        $region19: #{tpu_custom_call.1} parent=11 // pred_region
          %s181 = ssub.s32 1024, 1024
          %182 = vsyncadd [#allocation7], %s181
          %s183 = sshll.u32 [#allocation6], 4
          %s184 = int_to_ptr.vmem [resolvable:$true] %s183
          %189 = dma.hbm_to_vmem [thread:$0]  %s3, 1024, %s184, [#allocation7], 64, 64, 4
        $region20: #{tpu_custom_call.1} parent=11 // pred_fallthru
          _
      $region12: #{tpu_custom_call.1} parent=5 // pred_fallthru
        _
      %p190 = scmp.lt.s32.totalorder %s14, 2
      // Predicated region
      $region21: #{tpu_custom_call.1} parent=5 // pred_check
        %p191 = pneg %p190
      $region22: #{tpu_custom_call.1} parent=5 // pred_check_branch
        %193 = sbr.rel (%p191) target = $region24
      $region23: #{tpu_custom_call.1} parent=5 // pred_region
        // Predicated region
        $region25: #{tpu_custom_call.1} parent=23 // pred_check
          %p194 = pneg %p48
        $region26: #{tpu_custom_call.1} parent=23 // pred_check_branch
          %196 = sbr.rel (%p194) target = $region28
        $region27: #{tpu_custom_call.1} parent=23 // pred_region
          %s197 = sand.u32 %s38, 1
          %s198 = scalar_lea.sflag [#allocation5], %s197
          %s199 = sand.u32 %s38, 1
          %s200 = smul.addr %s199, 8
          %s201 = scalar_lea.vmem [#allocation4], %s200
          %s203 = ssub.s32 128, 128
          %204 = vsyncadd %s198, %s203
          %s205 = smul.addr %s21, 2
          %s206 = sadd.s32 %s22, %s205
          %s207 = smul.addr %s206, 128
          %s208 = scalar_lea.hbm %s0, %s207
          %s210 = sshll.u32 %s201, 4
          %s211 = int_to_ptr.vmem [resolvable:$true] %s210
          %213 = dma.hbm_to_vmem [thread:$0]  %s208, 128, %s211, %s198
        $region28: #{tpu_custom_call.1} parent=23 // pred_fallthru
          _
        // Predicated region
        $region29: #{tpu_custom_call.1} parent=23 // pred_check
          %p214 = pneg %p76
        $region30: #{tpu_custom_call.1} parent=23 // pred_check_branch
          %216 = sbr.rel (%p214) target = $region32
        $region31: #{tpu_custom_call.1} parent=23 // pred_region
          %p217 = scmp.lt.s32.totalorder %s21, 0
          %s218 = scalar_select %p217, %s21, 0
          %p219 = scmp.lt.s32.totalorder %s22, 1
          %s220 = scalar_select %p219, %s22, 1
          %s221 = smul.addr %s218, 2
          %s222 = sadd.s32 %s220, %s221
          %s223 = smul.addr %s222, 4
          %s224 = scalar_lea.vmem %s1, %s223
        $region32: #{tpu_custom_call.1} parent=23 // pred_fallthru
          _
      $region24: #{tpu_custom_call.1} parent=5 // pred_fallthru
        _
      %p225 = scmp.le.s32.totalorder 1, %s14
      %p226 = scmp.lt.s32.totalorder %s14, 3
      %p227 = pnand %p225, %p226
      %p228 = pneg %p227
      // Predicated region
      $region33: #{tpu_custom_call.1} parent=5 // pred_check
        _
      $region34: #{tpu_custom_call.1} parent=5 // pred_check_branch
        %230 = sbr.rel (%p227) target = $region36
      $region35: #{tpu_custom_call.1} parent=5 // pred_region
        %s231 = ssub.s32 %s14, 1
        %s232 = sand.u32 %s41, 1
        %s233 = scalar_lea.sflag [#allocation5], %s232
        %s234 = sand.u32 %s41, 1
        %s235 = smul.addr %s234, 8
        %s236 = scalar_lea.vmem [#allocation4], %s235
        // Predicated region
        $region37: #{tpu_custom_call.1} parent=35 // pred_check
          %p237 = pneg %p54
        $region38: #{tpu_custom_call.1} parent=35 // pred_check_branch
          %239 = sbr.rel (%p237) target = $region40
        $region39: #{tpu_custom_call.1} parent=35 // pred_region
          %240 = dma.done %s233, 128
        $region40: #{tpu_custom_call.1} parent=35 // pred_fallthru
          _
        // Predicated region
        $region41: #{tpu_custom_call.1} parent=35 // pred_check
          %p241 = pneg %p129
        $region42: #{tpu_custom_call.1} parent=35 // pred_check_branch
          %243 = sbr.rel (%p241) target = $region44
        $region43: #{tpu_custom_call.1} parent=35 // pred_region
          %244 = dma.done [#allocation7], 1024
        $region44: #{tpu_custom_call.1} parent=35 // pred_fallthru
          _
        %s245 = sand.u32 %s41, 1
        %s246 = scalar_lea.sflag [#allocation5], %s245
        %s247 = sand.u32 %s41, 1
        %s248 = smul.addr %s247, 8
        %s249 = scalar_lea.vmem [#allocation4], %s248
        %p250 = pneg %p54
        %p251 = pneg %p51
        %p252 = scmp.lt.s32.totalorder %s23, 0
        %s253 = scalar_select %p252, %s23, 0
        %p254 = scmp.lt.s32.totalorder %s24, 1
        %s255 = scalar_select %p254, %s24, 1
        %s256 = smul.addr %s253, 2
        %s257 = sadd.s32 %s255, %s256
        %s258 = smul.addr %s257, 4
        %s259 = scalar_lea.vmem %s1, %s258
        %p260 = pneg %p82
        %p261 = pneg %p79
        %p262 = scmp.lt.s32.totalorder %s23, 0
        %s263 = scalar_select %p262, %s23, 0
        %s264 = smul.addr %s263, 8
        %s265 = scalar_lea.vmem %s2, %s264
        %p266 = pneg %p108
        %p267 = pneg %p105
        %p268 = pneg %p129
        %p269 = pneg %p126
        %p270 = pneg %p155
        %p271 = pneg %p152
        %p272 = scmp.lt.s32.totalorder %s23, 0
        %s273 = scalar_select %p272, %s23, 0
        %s274 = smul.addr %s273, 8
        %s275 = scalar_lea.vmem %s4, %s274
        %p276 = scmp.lt.s32.totalorder %s23, 0
        %s277 = scalar_select %p276, %s23, 0
        %p278 = scmp.lt.s32.totalorder %s24, 1
        %s279 = scalar_select %p278, %s24, 1
        %s280 = smul.addr %s277, 2
        %s281 = sadd.s32 %s279, %s280
        %s282 = smul.addr %s281, 4
        %s283 = scalar_lea.vmem %s1, %s282
        %p284 = scmp.lt.s32.totalorder %s23, 0
        %s285 = scalar_select %p284, %s23, 0
        %s286 = smul.addr %s285, 8
        %s287 = scalar_lea.vmem %s2, %s286
        %p288 = scmp.lt.s32.totalorder %s23, 0
        %s289 = scalar_select %p288, %s23, 0
        %s290 = smul.addr %s289, 8
        %s291 = scalar_lea.vmem %s4, %s290
        %p293 = scmp.eq.s32.totalorder %s24, 0
        // Predicated region
        $region45: #{tpu_custom_call.1} parent=35 // pred_check
          %p294 = pneg %p293
        $region46: #{tpu_custom_call.1} parent=35 // pred_check_branch
          %296 = sbr.rel (%p294) target = $region48
        $region47: #{tpu_custom_call.1} parent=35 // pred_region
          %vm297 = vcmask 7168
          %298 = vst.msk [vmem:[%s291] sm:$0xff] %vm297, 0.0
          %299 = vst.msk [vmem:[#allocation2] sm:$0xff] %vm297, 0.0
          %300 = vst.msk [vmem:[#allocation3] sm:$0xff] %vm297, 0.0
        $region48: #{tpu_custom_call.1} parent=35 // pred_fallthru
          _
        %v301 = vld [vmem:[%s236] sm:$0xff]
        %v302 = vld [vmem:[%s283] sm:$0xf]
        %v303 = vld [vmem:[%s287] sm:$0xff]
        %v304 = vld [vmem:[#allocation6] sm:$0xf]
        %v305 = vld [vmem:[#allocation6 + $0x4] sm:$0xf]
        %v306 = vld [vmem:[#allocation6 + $0x8] sm:$0xf]
        %v307 = vld [vmem:[#allocation6 + $0xc] sm:$0xf]
        %v308 = vld [vmem:[#allocation6 + $0x10] sm:$0xf]
        %v309 = vld [vmem:[#allocation6 + $0x14] sm:$0xf]
        %v310 = vld [vmem:[#allocation6 + $0x18] sm:$0xf]
        %v311 = vld [vmem:[#allocation6 + $0x1c] sm:$0xf]
        %v312 = vld [vmem:[#allocation6 + $0x20] sm:$0xf]
        %v313 = vld [vmem:[#allocation6 + $0x24] sm:$0xf]
        %v314 = vld [vmem:[#allocation6 + $0x28] sm:$0xf]
        %v315 = vld [vmem:[#allocation6 + $0x2c] sm:$0xf]
        %v316 = vld [vmem:[#allocation6 + $0x30] sm:$0xf]
        %v317 = vld [vmem:[#allocation6 + $0x34] sm:$0xf]
        %v318 = vld [vmem:[#allocation6 + $0x38] sm:$0xf]
        %v319 = vld [vmem:[#allocation6 + $0x3c] sm:$0xf]
        %v320 = vld [vmem:[#allocation2] sm:$0xff]
        %322 = vset.pattern.permute.xlu0 0
        %323 = vperm.xlu0 %322, %v320
        %v324 = vpop.permute.xlu0 %323
        %v342 = vunpack.c.l.b16 %v304
        %v343 = vunpack.c.l.b16 %v305
        %v344 = vunpack.c.l.b16 %v306
        %v345 = vunpack.c.l.b16 %v307
        %v346 = vunpack.c.l.b16 %v308
        %v347 = vunpack.c.l.b16 %v309
        %v348 = vunpack.c.l.b16 %v310
        %v349 = vunpack.c.l.b16 %v311
        %v350 = vunpack.c.l.b16 %v312
        %v351 = vunpack.c.l.b16 %v313
        %v352 = vunpack.c.l.b16 %v314
        %v353 = vunpack.c.l.b16 %v315
        %v354 = vunpack.c.l.b16 %v316
        %v355 = vunpack.c.l.b16 %v317
        %v356 = vunpack.c.l.b16 %v318
        %v357 = vunpack.c.l.b16 %v319
        %v358 = vpack.c.b16 %v343, %v342
        %v359 = vpack.c.b16 %v345, %v344
        %v360 = vpack.c.b16 %v347, %v346
        %v361 = vpack.c.b16 %v349, %v348
        %v362 = vpack.c.b16 %v351, %v350
        %v363 = vpack.c.b16 %v353, %v352
        %v364 = vpack.c.b16 %v355, %v354
        %v365 = vpack.c.b16 %v357, %v356
        %374 = vmatprep.subr.bf16.mxu0 0
        %375 = vmatpush1.bf16.msra.mxu0 %v358
        %376 = vmatprep.subr.bf16.mxu0 0
        %377 = vmatpush1.bf16.msra.mxu0 %v359
        %378 = vmatprep.subr.bf16.mxu0 0
        %379 = vmatpush1.bf16.msra.mxu0 %v360
        %380 = vmatprep.subr.bf16.mxu0 0
        %381 = vmatpush1.bf16.msra.mxu0 %v361
        %382 = vmatprep.subr.bf16.mxu0 0
        %383 = vmatpush1.bf16.msra.mxu0 %v362
        %384 = vmatprep.subr.bf16.mxu0 0
        %385 = vmatpush1.bf16.msra.mxu0 %v363
        %386 = vmatprep.subr.bf16.mxu0 0
        %387 = vmatpush1.bf16.msra.mxu0 %v364
        %388 = vmatprep.subr.bf16.mxu0 0
        %389 = vmatpush1.bf16.msra.mxu0 %v365
        %390 = vmatprep.subr.bf16.mxu0 0
        %391 = vmatpush1.bf16.msra.mxu0 0
        %392 = vmatprep.subr.bf16.mxu0 0
        %393 = vmatpush1.bf16.msra.mxu0 0
        %394 = vmatprep.subr.bf16.mxu0 0
        %395 = vmatpush1.bf16.msra.mxu0 0
        %396 = vmatprep.subr.bf16.mxu0 0
        %397 = vmatpush1.bf16.msra.mxu0 0
        %398 = vmatprep.subr.bf16.mxu0 0
        %399 = vmatpush1.bf16.msra.mxu0 0
        %400 = vmatprep.subr.bf16.mxu0 0
        %401 = vmatpush1.bf16.msra.mxu0 0
        %402 = vmatprep.subr.bf16.mxu0 0
        %403 = vmatpush1.bf16.msra.mxu0 0
        %404 = vmatprep.subr.bf16.mxu0 0
        %405 = vmatpush1.bf16.msra.mxu0 0
        %406 = vmatprep.mubr.bf16.mxu0 0
        %407 = vmatmul.mubr.bf16.gmra.mrb[0].mxu0 %v302
        %v408 = vpop.f32.mrb[0].mxu0
        %v409 = vadd.f32 %v324, %v408
        %v410 = vpop.f32.mrb[0].mxu0
        %v411 = vpop.f32.mrb[0].mxu0
        %v412 = vpop.f32.mrb[0].mxu0
        %413 = vdwg.mxu0
        %v414 = vlaneseq
        %v415 = vand.u32 %v414, 127
        %s416 = smul.u32 %s24, 128
        %s417 = sadd.s32 %s416, 1
        %v418 = vstv %s417
        %v419 = vadd.s32 %v415, %v418
        %v420 = vcvt.s32.f32 %v419
        %422 = vset.pattern.permute.xlu0 0
        %423 = vperm.xlu0 %422, %v303
        %v424 = vpop.permute.xlu0 %423
        %v426 = vsub.f32 %v424, %v409
        %v427 = vadd.f32 %v424, %v420
        %v428 = vsub.f32 %v427, %v409
        %v429 = vrcp.pop %v428
        %v430 = vmul.f32 %v426, %v429
        %v431 = vsub.f32 1.0, %v430
        %432 = vrot.lane.b32.xlu0 %v431, 1
        %v433 = vpop.permute.xlu0 %432
        %vm434 = vcmp.eq.s32.totalorder %v415, 0
        %v435 = vld [vmem:[#allocation3] sm:$0xff]
        %437 = vset.pattern.permute.xlu0 0
        %438 = vperm.xlu0 %437, %v435
        %v439 = vpop.permute.xlu0 %438
        %v441 = vsel %vm434, %v439, %v433
        %v442 = vsub.f32 %v431, %v441
        %v443 = vld [vmem:[%s291] sm:$0xff]
        %v444 = vmax.f32 %v301, 0.0
        %v445 = vmul.f32 %v444, %v442
        %446 = vadd.xlane.f32.xlu0 %v445
        %v447 = vpop.xlane.xlu0 %446
        %v448 = vadd.f32 %v443, %v447
        %vm449 = vcmask 7168
        %450 = vst.msk [vmem:[%s291] sm:$0xff] %vm449, %v448
        %452 = vrot.lane.b32.xlu0 %v409, 1
        %v453 = vpop.permute.xlu0 %452
        %455 = vst.msk [vmem:[#allocation2] sm:$0xff] %vm449, %v453
        %457 = vrot.lane.b32.xlu0 %v431, 1
        %v458 = vpop.permute.xlu0 %457
        %460 = vst.msk [vmem:[#allocation3] sm:$0xff] %vm449, %v458
        %p461 = scmp.lt.s32.totalorder %s23, 0
        %s462 = scalar_select %p461, %s23, 0
        %s463 = smul.addr %s462, 8
        %s464 = scalar_lea.vmem %s4, %s463
        // Predicated region
        $region49: #{tpu_custom_call.1} parent=35 // pred_check
          %p465 = pneg %p152
        $region50: #{tpu_custom_call.1} parent=35 // pred_check_branch
          %467 = sbr.rel (%p465) target = $region52
        $region51: #{tpu_custom_call.1} parent=35 // pred_region
          _
        $region52: #{tpu_custom_call.1} parent=35 // pred_fallthru
          _
        // Predicated region
        $region53: #{tpu_custom_call.1} parent=35 // pred_check
          %p468 = pneg %p152
        $region54: #{tpu_custom_call.1} parent=35 // pred_check_branch
          %470 = sbr.rel (%p468) target = $region56
        $region55: #{tpu_custom_call.1} parent=35 // pred_region
          %p471 = scmp.lt.s32.totalorder %s23, 0
          %s472 = scalar_select %p471, %s23, 0
          %s473 = smul.addr %s472, 8
          %s474 = scalar_lea.vmem %s4, %s473
        $region56: #{tpu_custom_call.1} parent=35 // pred_fallthru
          _
      $region36: #{tpu_custom_call.1} parent=5 // pred_fallthru
        _
      %p475 = scmp.le.s32.totalorder 2, %s14
      // Predicated region
      $region57: #{tpu_custom_call.1} parent=5 // pred_check
        %p476 = pneg %p475
      $region58: #{tpu_custom_call.1} parent=5 // pred_check_branch
        %478 = sbr.rel (%p476) target = $region60
      $region59: #{tpu_custom_call.1} parent=5 // pred_region
        %s479 = ssub.s32 %s14, 2
      $region60: #{tpu_custom_call.1} parent=5 // pred_fallthru
        _
    $region6: #{tpu_custom_call.1} parent=1 // loop_footer
      %s18 = sadd.s32 1, %s14
    $region7: #{tpu_custom_call.1} parent=1 // loop_footer_branch
      %13 = sbr.rel target = $region3
    $region8: #{tpu_custom_call.1} parent=1 // loop_exit
      _
    %480 = vsyncpa [#allocation5], 1
    %s481 = scalar_lea.sflag [#allocation5], 1
    %482 = vsyncpa %s481, 1
    %483 = vsyncpa [#allocation7], 1

</llo_original>
